<compile_context>
chip_gen: v5e
topology: v5e:2x2
jax: 0.10.0
libtpu: 0.0.40
codegen_flags: <defaults>
</compile_context>

<pallas_src>
import functools

import jax
import jax.numpy as jnp
from jax.experimental import pallas as pl
from jax.experimental.pallas import tpu as pltpu

LN_EPS = 1e-5
_LANE = 128


def _round_up(n, m):
    return -(-n // m) * m


def _conv_ln_relu_kernel(
    lens_ref,                 # SMEM (B,) int32            (scalar prefetch)
    xe_ref, xo_ref,           # VMEM (C_in, TILE_T)        even / odd stride-2 phases of x
    halo_ref,                 # VMEM (C_in, 128)           right halo of the even phase
    w_ref,                    # VMEM (F, C_in*K)           w[f, ci*K + k] = weight[f, ci, k]
    gamma_ref, beta_ref,      # VMEM (F, 1)                LayerNorm parameters
    o_ref,                    # VMEM (F, TILE_T)           output tile, time lane-dense
    *, taps, tile_t, chunk_t, stride, left, ln_eps,
):
    b = pl.program_id(0)
    t0 = pl.program_id(1) * tile_t
    seq_len = lens_ref[b]

    c_in = xe_ref.shape[0]
    n_f = o_ref.shape[0]
    k_total = len(taps)
    n_chunks = tile_t // chunk_t

    w = w_ref[...].astype(jnp.float32)                       # (F, C_in*K)
    gamma = gamma_ref[...].astype(jnp.float32)               # (F, 1)
    beta = beta_ref[...].astype(jnp.float32)                 # (F, 1)
    lane = jax.lax.broadcasted_iota(jnp.int32, (1, chunk_t), 1)

    phase_refs = (xe_ref, xo_ref)

    # Statically unrolled loop over compute sub-chunks: the DMA block stays TILE_T wide (to
    # amortize the fixed per-grid-step cost), the live vreg footprint stays (F, CHUNK_T).
    for c in range(n_chunks):
        base = c * chunk_t
        phs = [phase_refs[p][:, pl.ds(base, chunk_t)].astype(jnp.float32)
               for p in range(stride)]

        acc = jnp.zeros((n_f, chunk_t), jnp.float32)
        for k, (p, o) in enumerate(taps):
            if o == 0:
                tap = phs[p]
            else:  # o == 1 (enforced in the wrapper): bring phase element t+1 into lane t
                if c + 1 < n_chunks:                         # next element is inside this block
                    nxt = phase_refs[p][:, pl.ds(base + chunk_t, 1)]
                else:                                        # ... or in the 128-lane halo block
                    nxt = halo_ref[:, pl.ds(0, 1)]
                nxt = nxt.astype(jnp.float32)
                shifted = pltpu.roll(phs[p], shift=chunk_t - o, axis=1)   # == jnp.roll(ph, -o)
                tap = jnp.where(lane >= chunk_t - o, nxt, shifted)
            # Fused masked_fill(pad_mask, 0) + TF-'same' left/right zero padding, expressed in
            # original-x coordinates.  Any garbage from ragged / clamped blocks is selected to
            # 0.0 here before it can touch the accumulator.
            idx = stride * (t0 + base + lane + o) + (p - left)
            tap = jnp.where(jnp.logical_and(idx >= 0, idx < seq_len), tap, 0.0)
            # Conv as VPU broadcast-FMAs: acc[f, t] += weight[f, ci, k] * tap[ci, t]
            for ci in range(c_in):
                j = ci * k_total + k
                tap_b = jnp.broadcast_to(tap[ci:ci + 1, :], (n_f, chunk_t))   # sublane broadcast
                acc = acc + tap_b * w[:, j:j + 1]                             # lane broadcast

        # LayerNorm over the channel (sublane) axis, statistics in f32.
        mean = jnp.mean(acc, axis=0, keepdims=True)          # (1, CHUNK_T)
        ctr = acc - mean
        var = jnp.mean(ctr * ctr, axis=0, keepdims=True)
        y = ctr * jax.lax.rsqrt(var + ln_eps)
        y = y * gamma + beta
        # ReLU (dropout == 0 -> identity); output already in (B, F, T_out) layout.
        o_ref[:, pl.ds(base, chunk_t)] = jnp.maximum(y, 0.0).astype(o_ref.dtype)


@functools.partial(jax.jit, static_argnames=("kernel_size", "stride", "tile_t"))
def conv_norm_act(x, lens, pad_mask, weight, gamma, beta, *, kernel_size, stride, tile_t=2048):
    """ConvNormAct forward (1d conv, tf 'same' pad, LayerNorm over channels, ReLU, dropout=0).

    x: (B, C_in, T) f32 (NCW), lens: (B,) int32, pad_mask: (B, T) bool,
    weight: (F, C_in, K) (no bias since norm_type='ln'), gamma/beta: (F,).
    Returns (output (B, F, T_out), lens_out (B,), pad_mask_out (B, T_out)).

    NOTE: pad_mask is accepted for API parity; the module always builds it as
    create_pad_mask(lens, T), so the kernel re-derives the masked_fill from `lens`
    (SMEM scalar prefetch) so the masking can be fused with the conv.
    """
    del pad_mask
    B, C_in, T = x.shape
    F_out, C_in_w, K = weight.shape
    assert C_in_w == C_in and K == kernel_size and K % 2 == 1
    S = stride
    assert S == 2, "TODO(synk): only the stride=2 configuration of the module is implemented"
    assert (K - 1) // S <= 1, "TODO(synk): taps spanning >1 phase element not implemented"

    # pad_like_tf (1d branch): parity check on dim -2 (== channels for Conv1d), as in the reference
    phk = K // 2
    if C_in % 2 == 0 and S == 2:
        left, right = phk - 1, phk        # even_pad_num
    else:
        left, right = phk, phk            # pad_num

    T_out = (T + left + right - K) // S + 1

    # Tile selection: big DMA blocks; keep >= 2 parallel grid slices when the batch alone does
    # not provide them (v7x has 2 TensorCores that share the "parallel" grid axes).
    TILE_T = min(_round_up(max(tile_t, 1), _LANE), _round_up(T_out, _LANE))
    num_t = pl.cdiv(T_out, TILE_T)
    if B == 1 and num_t == 1 and T_out > _LANE:
        TILE_T = _round_up(pl.cdiv(T_out, 2), _LANE)
        num_t = pl.cdiv(T_out, TILE_T)
    CHUNK_T = next(c for c in (512, 256, 128) if TILE_T % c == 0)

    # TF-'same' left pad (== 0 for the even-C_in / stride-2 case of this module instance, so no
    # host copy is made there).  Right pad + pad_mask masked_fill are fused into the kernel.
    x_lp = jnp.pad(x, ((0, 0), (0, 0), (left, 0))) if left > 0 else x
    # Stride-2 phase split: x_even[..., t] = x_lp[..., 2t], x_odd[..., t] = x_lp[..., 2t+1].
    # TODO(synk): single remaining host-side pass (no lane-strided vector loads in Mosaic).
    x_even = x_lp[:, :, 0::S]
    x_odd = x_lp[:, :, 1::S]
    Te = x_even.shape[-1]
    To = x_odd.shape[-1]

    w_mat = weight.reshape(F_out, C_in * K).astype(jnp.float32)   # w_mat[f, ci*K+k] = weight[f,ci,k]
    g2 = gamma.reshape(F_out, 1).astype(jnp.float32)
    b2 = beta.reshape(F_out, 1).astype(jnp.float32)

    taps = tuple((k % S, k // S) for k in range(K))   # tap k reads phase (k % S) at offset (k // S)
    r_halo = TILE_T // _LANE
    # Clamps keep every DMA window's block index valid; any stale/ragged data this exposes is at
    # positions with idx >= T >= lens and is therefore zeroed by the in-kernel mask.
    e_hmax = pl.cdiv(Te, _LANE) - 1
    o_bmax = max(pl.cdiv(To, TILE_T) - 1, 0)

    kernel = functools.partial(
        _conv_ln_relu_kernel,
        taps=taps, tile_t=TILE_T, chunk_t=CHUNK_T, stride=S, left=left, ln_eps=LN_EPS)

    grid_spec = pltpu.PrefetchScalarGridSpec(
        num_scalar_prefetch=1,
        grid=(B, num_t),
        in_specs=[
            pl.BlockSpec((None, C_in, TILE_T), lambda b, t, _l: (b, 0, t)),                # even
            pl.BlockSpec((None, C_in, TILE_T),
                         lambda b, t, _l: (b, 0, jnp.minimum(t, o_bmax))),                 # odd
            pl.BlockSpec((None, C_in, _LANE),
                         lambda b, t, _l: (b, 0, jnp.minimum((t + 1) * r_halo, e_hmax))),  # halo
            pl.BlockSpec((F_out, C_in * K), lambda b, t, _l: (0, 0)),                      # weight
            pl.BlockSpec((F_out, 1), lambda b, t, _l: (0, 0)),                             # gamma
            pl.BlockSpec((F_out, 1), lambda b, t, _l: (0, 0)),                             # beta
        ],
        out_specs=pl.BlockSpec((None, F_out, TILE_T), lambda b, t, _l: (b, 0, t)),
    )

    output = pl.pallas_call(
        kernel,
        out_shape=jax.ShapeDtypeStruct((B, F_out, T_out), x.dtype),   # exact; ragged tail clipped
        grid_spec=grid_spec,
        compiler_params=pltpu.CompilerParams(
            dimension_semantics=("parallel", "parallel")),            # megacore sharding on v7x
    )(lens.astype(jnp.int32), x_even, x_odd, x_even, w_mat, g2, b2)

    # subsample_factor > 1: update lens and rebuild pad_mask (tf 'same' branch of the reference)
    lens_out = (lens + S - 1) // S
    pad_mask_out = jnp.arange(T_out)[None, :] >= lens_out[:, None]
    return output, lens_out, pad_mask_out


def _reference_forward(x, lens, pad_mask, weight, gamma, beta, *, kernel_size, stride):
    """Pure-JAX (XLA) replica of ConvNormAct.forward, used to validate the Pallas kernel."""
    del lens
    B, C_in, T = x.shape
    K = kernel_size
    phk = K // 2
    if C_in % 2 == 0 and stride == 2:
        left, right = phk - 1, phk
    else:
        left, right = phk, phk
    xz = jnp.where(pad_mask[:, None, :], 0.0, x)
    xp = jnp.pad(xz, ((0, 0), (0, 0), (left, right)))
    y = jax.lax.conv_general_dilated(
        xp, weight, window_strides=(stride,), padding="VALID",
        dimension_numbers=("NCH", "OIH", "NCH"),
        precision=jax.lax.Precision.HIGHEST)
    mean = jnp.mean(y, axis=1, keepdims=True)
    var = jnp.mean((y - mean) ** 2, axis=1, keepdims=True)
    yn = (y - mean) * jax.lax.rsqrt(var + LN_EPS)
    yn = yn * gamma[None, :, None] + beta[None, :, None]
    return jnp.maximum(yn, 0.0)


if __name__ == "__main__":
    # Shapes consistent with the module: batch=2, in_channels=4, filters=8, kernel=3, stride=2.
    B, C_IN, FILTERS, KSIZE, STRIDE = 2, 4, 8, 3, 2

    key = jax.random.PRNGKey(0)
    kx, kw, kg, kb, kx2 = jax.random.split(key, 5)

    weight = 0.1 * jax.random.normal(kw, (FILTERS, C_IN, KSIZE), dtype=jnp.float32)
    gamma = 1.0 + 0.1 * jax.random.normal(kg, (FILTERS,), dtype=jnp.float32)
    beta = 0.1 * jax.random.normal(kb, (FILTERS,), dtype=jnp.float32)

    def run_case(key_x, T, lens_list, tile_t):
        x = jax.random.normal(key_x, (B, C_IN, T), dtype=jnp.float32)
        lens = jnp.array(lens_list, dtype=jnp.int32)
        pad_mask = jnp.arange(T)[None, :] >= lens[:, None]          # create_pad_mask
        out, lens_out, pm_out = conv_norm_act(
            x, lens, pad_mask, weight, gamma, beta,
            kernel_size=KSIZE, stride=STRIDE, tile_t=tile_t)
        jax.block_until_ready((out, lens_out, pm_out))

        T_OUT = (T + STRIDE - 1) // STRIDE
        assert out.shape == (B, FILTERS, T_OUT), out.shape
        assert lens_out.shape == (B,) and pm_out.shape == (B, T_OUT)

        ref = _reference_forward(x, lens, pad_mask, weight, gamma, beta,
                                 kernel_size=KSIZE, stride=STRIDE)
        err = float(jnp.max(jnp.abs(out - ref)))
        assert err < 2e-4, f"T={T} tile_t={tile_t}: max abs error vs reference: {err}"
        assert bool(jnp.all(lens_out == (lens + STRIDE - 1) // STRIDE))
        assert bool(jnp.all(pm_out == (jnp.arange(T_OUT)[None, :] >= lens_out[:, None])))

    # Small shape of the module instance (T=16), single tile / single chunk.
    run_case(kx, 16, [16, 11], 2048)
    # Longer sequence, default fat tile: exercises the inner chunk loop, ragged edge blocks
    # and the clamped halo at the sequence end.
    run_case(kx2, 2100, [2100, 1337], 2048)
    # Small tiles: exercises multiple grid tiles with real cross-tile halos + ragged last tile.
    run_case(kx2, 2100, [2100, 1337], 256)

    # TODO(synk): BatchNorm/GroupNorm norm_type variants, dropout>0 and the 2d-conv path are not
    # implemented (this instance uses norm_type='ln', act='relu', dropout=0.0, conv_type='1d').

    print("KERNEL_OK")
</pallas_src>

<mosaic_0001>
module attributes {stable_mosaic.version = 11 : i64} {
  func.func @_conv_ln_relu_kernel(%arg0: i32, %arg1: i32, %arg2: memref<2xi32, #tpu.memory_space<smem>>, %arg3: memref<1x4x128xf32, #tpu.memory_space<vmem>>, %arg4: memref<1x4x128xf32, #tpu.memory_space<vmem>>, %arg5: memref<1x4x128xf32, #tpu.memory_space<vmem>>, %arg6: memref<8x12xf32, #tpu.memory_space<vmem>>, %arg7: memref<8x1xf32, #tpu.memory_space<vmem>>, %arg8: memref<8x1xf32, #tpu.memory_space<vmem>>, %arg9: memref<1x8x128xf32, #tpu.memory_space<vmem>>) attributes {dimension_semantics = [#tpu.dimension_semantics<parallel>, #tpu.dimension_semantics<parallel>], iteration_bounds = array<i64: 2, 1>, scalar_prefetch = 1 : i64, scratch_operands = 0 : i64, tpu.core_type = #tpu.core_type<tc>, window_params = [{transform_indices = @transform_0, window_bounds = array<i64: 1, 4, 128>}, {transform_indices = @transform_1, window_bounds = array<i64: 1, 4, 128>}, {transform_indices = @transform_2, window_bounds = array<i64: 1, 4, 128>}, {pipeline_mode = #tpu.pipeline_mode<synchronous>, transform_indices = @transform_3, window_bounds = array<i64: 8, 12>}, {pipeline_mode = #tpu.pipeline_mode<synchronous>, transform_indices = @transform_4, window_bounds = array<i64: 8, 1>}, {pipeline_mode = #tpu.pipeline_mode<synchronous>, transform_indices = @transform_5, window_bounds = array<i64: 8, 1>}, {transform_indices = @transform_6, window_bounds = array<i64: 1, 8, 128>}]} {
    %c128_i32 = arith.constant 128 : i32
    %0 = arith.muli %arg1, %c128_i32 : i32
    %1 = arith.index_cast %arg0 : i32 to index
    %2 = memref.load %arg2[%1] : memref<2xi32, #tpu.memory_space<smem>>
    %c0 = arith.constant 0 : index
    %c0_0 = arith.constant 0 : index
    %3 = vector.load %arg6[%c0, %c0_0] : memref<8x12xf32, #tpu.memory_space<vmem>>, vector<8x12xf32>
    %c0_1 = arith.constant 0 : index
    %c0_2 = arith.constant 0 : index
    %4 = vector.load %arg7[%c0_1, %c0_2] : memref<8x1xf32, #tpu.memory_space<vmem>>, vector<8x1xf32>
    %c0_3 = arith.constant 0 : index
    %c0_4 = arith.constant 0 : index
    %5 = vector.load %arg8[%c0_3, %c0_4] : memref<8x1xf32, #tpu.memory_space<vmem>>, vector<8x1xf32>
    %6 = tpu.iota {dimensions = array<i32: 1>} : vector<1x128xi32>
    %c0_5 = arith.constant 0 : index
    %c0_6 = arith.constant 0 : index
    %c0_7 = arith.constant 0 : index
    %7 = vector.load %arg3[%c0_5, %c0_6, %c0_7] : memref<1x4x128xf32, #tpu.memory_space<vmem>>, vector<1x4x128xf32>
    %8 = vector.shape_cast %7 : vector<1x4x128xf32> to vector<4x128xf32>
    %c0_8 = arith.constant 0 : index
    %c0_9 = arith.constant 0 : index
    %c0_10 = arith.constant 0 : index
    %9 = vector.load %arg4[%c0_8, %c0_9, %c0_10] : memref<1x4x128xf32, #tpu.memory_space<vmem>>, vector<1x4x128xf32>
    %10 = vector.shape_cast %9 : vector<1x4x128xf32> to vector<4x128xf32>
    %cst = arith.constant 0.000000e+00 : f32
    %11 = vector.broadcast %cst : f32 to vector<8x128xf32>
    %c0_i32 = arith.constant 0 : i32
    %12 = arith.addi %0, %c0_i32 : i32
    %13 = vector.broadcast %12 : i32 to vector<1x128xi32>
    %14 = arith.addi %13, %6 : vector<1x128xi32>
    %c0_i32_11 = arith.constant 0 : i32
    %15 = vector.broadcast %c0_i32_11 : i32 to vector<1x128xi32>
    %16 = arith.addi %14, %15 : vector<1x128xi32>
    %c2_i32 = arith.constant 2 : i32
    %17 = vector.broadcast %c2_i32 : i32 to vector<1x128xi32>
    %18 = arith.muli %17, %16 : vector<1x128xi32>
    %c0_i32_12 = arith.constant 0 : i32
    %19 = vector.broadcast %c0_i32_12 : i32 to vector<1x128xi32>
    %20 = arith.addi %18, %19 : vector<1x128xi32>
    %c0_i32_13 = arith.constant 0 : i32
    %21 = vector.broadcast %c0_i32_13 : i32 to vector<1x128xi32>
    %22 = arith.cmpi sge, %20, %21 : vector<1x128xi32>
    %23 = vector.broadcast %2 : i32 to vector<1x128xi32>
    %24 = arith.cmpi slt, %20, %23 : vector<1x128xi32>
    %25 = arith.andi %22, %24 : vector<1x128xi1>
    %cst_14 = arith.constant 0.000000e+00 : f32
    %26 = vector.shape_cast %25 : vector<1x128xi1> to vector<1x128xi1>
    %27 = vector.broadcast %26 : vector<1x128xi1> to vector<4x128xi1>
    %28 = vector.broadcast %cst_14 : f32 to vector<4x128xf32>
    %29 = arith.select %27, %8, %28 : vector<4x128xi1>, vector<4x128xf32>
    %30 = vector.extract_strided_slice %29 {offsets = [0, 0], sizes = [1, 128], strides = [1, 1]} : vector<4x128xf32> to vector<1x128xf32>
    %31 = vector.shape_cast %30 : vector<1x128xf32> to vector<1x128xf32>
    %32 = vector.broadcast %31 : vector<1x128xf32> to vector<8x128xf32>
    %33 = vector.extract_strided_slice %3 {offsets = [0, 0], sizes = [8, 1], strides = [1, 1]} : vector<8x12xf32> to vector<8x1xf32>
    %34 = vector.broadcast %33 : vector<8x1xf32> to vector<8x128xf32>
    %35 = arith.mulf %32, %34 : vector<8x128xf32>
    %36 = arith.addf %11, %35 : vector<8x128xf32>
    %37 = vector.extract_strided_slice %29 {offsets = [1, 0], sizes = [1, 128], strides = [1, 1]} : vector<4x128xf32> to vector<1x128xf32>
    %38 = vector.shape_cast %37 : vector<1x128xf32> to vector<1x128xf32>
    %39 = vector.broadcast %38 : vector<1x128xf32> to vector<8x128xf32>
    %40 = vector.extract_strided_slice %3 {offsets = [0, 3], sizes = [8, 1], strides = [1, 1]} : vector<8x12xf32> to vector<8x1xf32>
    %41 = vector.broadcast %40 : vector<8x1xf32> to vector<8x128xf32>
    %42 = arith.mulf %39, %41 : vector<8x128xf32>
    %43 = arith.addf %36, %42 : vector<8x128xf32>
    %44 = vector.extract_strided_slice %29 {offsets = [2, 0], sizes = [1, 128], strides = [1, 1]} : vector<4x128xf32> to vector<1x128xf32>
    %45 = vector.shape_cast %44 : vector<1x128xf32> to vector<1x128xf32>
    %46 = vector.broadcast %45 : vector<1x128xf32> to vector<8x128xf32>
    %47 = vector.extract_strided_slice %3 {offsets = [0, 6], sizes = [8, 1], strides = [1, 1]} : vector<8x12xf32> to vector<8x1xf32>
    %48 = vector.broadcast %47 : vector<8x1xf32> to vector<8x128xf32>
    %49 = arith.mulf %46, %48 : vector<8x128xf32>
    %50 = arith.addf %43, %49 : vector<8x128xf32>
    %51 = vector.extract_strided_slice %29 {offsets = [3, 0], sizes = [1, 128], strides = [1, 1]} : vector<4x128xf32> to vector<1x128xf32>
    %52 = vector.shape_cast %51 : vector<1x128xf32> to vector<1x128xf32>
    %53 = vector.broadcast %52 : vector<1x128xf32> to vector<8x128xf32>
    %54 = vector.extract_strided_slice %3 {offsets = [0, 9], sizes = [8, 1], strides = [1, 1]} : vector<8x12xf32> to vector<8x1xf32>
    %55 = vector.broadcast %54 : vector<8x1xf32> to vector<8x128xf32>
    %56 = arith.mulf %53, %55 : vector<8x128xf32>
    %57 = arith.addf %50, %56 : vector<8x128xf32>
    %c0_i32_15 = arith.constant 0 : i32
    %58 = arith.addi %0, %c0_i32_15 : i32
    %59 = vector.broadcast %58 : i32 to vector<1x128xi32>
    %60 = arith.addi %59, %6 : vector<1x128xi32>
    %c0_i32_16 = arith.constant 0 : i32
    %61 = vector.broadcast %c0_i32_16 : i32 to vector<1x128xi32>
    %62 = arith.addi %60, %61 : vector<1x128xi32>
    %c2_i32_17 = arith.constant 2 : i32
    %63 = vector.broadcast %c2_i32_17 : i32 to vector<1x128xi32>
    %64 = arith.muli %63, %62 : vector<1x128xi32>
    %c1_i32 = arith.constant 1 : i32
    %65 = vector.broadcast %c1_i32 : i32 to vector<1x128xi32>
    %66 = arith.addi %64, %65 : vector<1x128xi32>
    %c0_i32_18 = arith.constant 0 : i32
    %67 = vector.broadcast %c0_i32_18 : i32 to vector<1x128xi32>
    %68 = arith.cmpi sge, %66, %67 : vector<1x128xi32>
    %69 = vector.broadcast %2 : i32 to vector<1x128xi32>
    %70 = arith.cmpi slt, %66, %69 : vector<1x128xi32>
    %71 = arith.andi %68, %70 : vector<1x128xi1>
    %cst_19 = arith.constant 0.000000e+00 : f32
    %72 = vector.shape_cast %71 : vector<1x128xi1> to vector<1x128xi1>
    %73 = vector.broadcast %72 : vector<1x128xi1> to vector<4x128xi1>
    %74 = vector.broadcast %cst_19 : f32 to vector<4x128xf32>
    %75 = arith.select %73, %10, %74 : vector<4x128xi1>, vector<4x128xf32>
    %76 = vector.extract_strided_slice %75 {offsets = [0, 0], sizes = [1, 128], strides = [1, 1]} : vector<4x128xf32> to vector<1x128xf32>
    %77 = vector.shape_cast %76 : vector<1x128xf32> to vector<1x128xf32>
    %78 = vector.broadcast %77 : vector<1x128xf32> to vector<8x128xf32>
    %79 = vector.extract_strided_slice %3 {offsets = [0, 1], sizes = [8, 1], strides = [1, 1]} : vector<8x12xf32> to vector<8x1xf32>
    %80 = vector.broadcast %79 : vector<8x1xf32> to vector<8x128xf32>
    %81 = arith.mulf %78, %80 : vector<8x128xf32>
    %82 = arith.addf %57, %81 : vector<8x128xf32>
    %83 = vector.extract_strided_slice %75 {offsets = [1, 0], sizes = [1, 128], strides = [1, 1]} : vector<4x128xf32> to vector<1x128xf32>
    %84 = vector.shape_cast %83 : vector<1x128xf32> to vector<1x128xf32>
    %85 = vector.broadcast %84 : vector<1x128xf32> to vector<8x128xf32>
    %86 = vector.extract_strided_slice %3 {offsets = [0, 4], sizes = [8, 1], strides = [1, 1]} : vector<8x12xf32> to vector<8x1xf32>
    %87 = vector.broadcast %86 : vector<8x1xf32> to vector<8x128xf32>
    %88 = arith.mulf %85, %87 : vector<8x128xf32>
    %89 = arith.addf %82, %88 : vector<8x128xf32>
    %90 = vector.extract_strided_slice %75 {offsets = [2, 0], sizes = [1, 128], strides = [1, 1]} : vector<4x128xf32> to vector<1x128xf32>
    %91 = vector.shape_cast %90 : vector<1x128xf32> to vector<1x128xf32>
    %92 = vector.broadcast %91 : vector<1x128xf32> to vector<8x128xf32>
    %93 = vector.extract_strided_slice %3 {offsets = [0, 7], sizes = [8, 1], strides = [1, 1]} : vector<8x12xf32> to vector<8x1xf32>
    %94 = vector.broadcast %93 : vector<8x1xf32> to vector<8x128xf32>
    %95 = arith.mulf %92, %94 : vector<8x128xf32>
    %96 = arith.addf %89, %95 : vector<8x128xf32>
    %97 = vector.extract_strided_slice %75 {offsets = [3, 0], sizes = [1, 128], strides = [1, 1]} : vector<4x128xf32> to vector<1x128xf32>
    %98 = vector.shape_cast %97 : vector<1x128xf32> to vector<1x128xf32>
    %99 = vector.broadcast %98 : vector<1x128xf32> to vector<8x128xf32>
    %100 = vector.extract_strided_slice %3 {offsets = [0, 10], sizes = [8, 1], strides = [1, 1]} : vector<8x12xf32> to vector<8x1xf32>
    %101 = vector.broadcast %100 : vector<8x1xf32> to vector<8x128xf32>
    %102 = arith.mulf %99, %101 : vector<8x128xf32>
    %103 = arith.addf %96, %102 : vector<8x128xf32>
    %c0_20 = arith.constant 0 : index
    %c0_21 = arith.constant 0 : index
    %c0_22 = arith.constant 0 : index
    %104 = vector.load %arg5[%c0_20, %c0_21, %c0_22] : memref<1x4x128xf32, #tpu.memory_space<vmem>>, vector<1x4x1xf32>
    %105 = vector.shape_cast %104 : vector<1x4x1xf32> to vector<4x1xf32>
    %c127_i32 = arith.constant 127 : i32
    %106 = tpu.dynamic_rotate %8 by %c127_i32 dim 1 : vector<4x128xf32>, i32 -> vector<4x128xf32>
    %c127_i32_23 = arith.constant 127 : i32
    %107 = vector.broadcast %c127_i32_23 : i32 to vector<1x128xi32>
    %108 = arith.cmpi sge, %6, %107 : vector<1x128xi32>
    %109 = vector.shape_cast %108 : vector<1x128xi1> to vector<1x128xi1>
    %110 = vector.broadcast %109 : vector<1x128xi1> to vector<4x128xi1>
    %111 = vector.shape_cast %105 : vector<4x1xf32> to vector<4x1xf32>
    %112 = vector.broadcast %111 : vector<4x1xf32> to vector<4x128xf32>
    %113 = arith.select %110, %112, %106 : vector<4x128xi1>, vector<4x128xf32>
    %c0_i32_24 = arith.constant 0 : i32
    %114 = arith.addi %0, %c0_i32_24 : i32
    %115 = vector.broadcast %114 : i32 to vector<1x128xi32>
    %116 = arith.addi %115, %6 : vector<1x128xi32>
    %c1_i32_25 = arith.constant 1 : i32
    %117 = vector.broadcast %c1_i32_25 : i32 to vector<1x128xi32>
    %118 = arith.addi %116, %117 : vector<1x128xi32>
    %c2_i32_26 = arith.constant 2 : i32
    %119 = vector.broadcast %c2_i32_26 : i32 to vector<1x128xi32>
    %120 = arith.muli %119, %118 : vector<1x128xi32>
    %c0_i32_27 = arith.constant 0 : i32
    %121 = vector.broadcast %c0_i32_27 : i32 to vector<1x128xi32>
    %122 = arith.addi %120, %121 : vector<1x128xi32>
    %c0_i32_28 = arith.constant 0 : i32
    %123 = vector.broadcast %c0_i32_28 : i32 to vector<1x128xi32>
    %124 = arith.cmpi sge, %122, %123 : vector<1x128xi32>
    %125 = vector.broadcast %2 : i32 to vector<1x128xi32>
    %126 = arith.cmpi slt, %122, %125 : vector<1x128xi32>
    %127 = arith.andi %124, %126 : vector<1x128xi1>
    %cst_29 = arith.constant 0.000000e+00 : f32
    %128 = vector.shape_cast %127 : vector<1x128xi1> to vector<1x128xi1>
    %129 = vector.broadcast %128 : vector<1x128xi1> to vector<4x128xi1>
    %130 = vector.broadcast %cst_29 : f32 to vector<4x128xf32>
    %131 = arith.select %129, %113, %130 : vector<4x128xi1>, vector<4x128xf32>
    %132 = vector.extract_strided_slice %131 {offsets = [0, 0], sizes = [1, 128], strides = [1, 1]} : vector<4x128xf32> to vector<1x128xf32>
    %133 = vector.shape_cast %132 : vector<1x128xf32> to vector<1x128xf32>
    %134 = vector.broadcast %133 : vector<1x128xf32> to vector<8x128xf32>
    %135 = vector.extract_strided_slice %3 {offsets = [0, 2], sizes = [8, 1], strides = [1, 1]} : vector<8x12xf32> to vector<8x1xf32>
    %136 = vector.broadcast %135 : vector<8x1xf32> to vector<8x128xf32>
    %137 = arith.mulf %134, %136 : vector<8x128xf32>
    %138 = arith.addf %103, %137 : vector<8x128xf32>
    %139 = vector.extract_strided_slice %131 {offsets = [1, 0], sizes = [1, 128], strides = [1, 1]} : vector<4x128xf32> to vector<1x128xf32>
    %140 = vector.shape_cast %139 : vector<1x128xf32> to vector<1x128xf32>
    %141 = vector.broadcast %140 : vector<1x128xf32> to vector<8x128xf32>
    %142 = vector.extract_strided_slice %3 {offsets = [0, 5], sizes = [8, 1], strides = [1, 1]} : vector<8x12xf32> to vector<8x1xf32>
    %143 = vector.broadcast %142 : vector<8x1xf32> to vector<8x128xf32>
    %144 = arith.mulf %141, %143 : vector<8x128xf32>
    %145 = arith.addf %138, %144 : vector<8x128xf32>
    %146 = vector.extract_strided_slice %131 {offsets = [2, 0], sizes = [1, 128], strides = [1, 1]} : vector<4x128xf32> to vector<1x128xf32>
    %147 = vector.shape_cast %146 : vector<1x128xf32> to vector<1x128xf32>
    %148 = vector.broadcast %147 : vector<1x128xf32> to vector<8x128xf32>
    %149 = vector.extract_strided_slice %3 {offsets = [0, 8], sizes = [8, 1], strides = [1, 1]} : vector<8x12xf32> to vector<8x1xf32>
    %150 = vector.broadcast %149 : vector<8x1xf32> to vector<8x128xf32>
    %151 = arith.mulf %148, %150 : vector<8x128xf32>
    %152 = arith.addf %145, %151 : vector<8x128xf32>
    %153 = vector.extract_strided_slice %131 {offsets = [3, 0], sizes = [1, 128], strides = [1, 1]} : vector<4x128xf32> to vector<1x128xf32>
    %154 = vector.shape_cast %153 : vector<1x128xf32> to vector<1x128xf32>
    %155 = vector.broadcast %154 : vector<1x128xf32> to vector<8x128xf32>
    %156 = vector.extract_strided_slice %3 {offsets = [0, 11], sizes = [8, 1], strides = [1, 1]} : vector<8x12xf32> to vector<8x1xf32>
    %157 = vector.broadcast %156 : vector<8x1xf32> to vector<8x128xf32>
    %158 = arith.mulf %155, %157 : vector<8x128xf32>
    %159 = arith.addf %152, %158 : vector<8x128xf32>
    %cst_30 = arith.constant dense<0.000000e+00> : vector<128xf32>
    %160 = vector.multi_reduction <add>, %159, %cst_30 [0] : vector<8x128xf32> to vector<128xf32>
    %161 = vector.shape_cast %160 : vector<128xf32> to vector<1x128xf32>
    %cst_31 = arith.constant 8.000000e+00 : f32
    %162 = vector.broadcast %cst_31 : f32 to vector<1x128xf32>
    %163 = arith.divf %161, %162 : vector<1x128xf32>
    %164 = vector.broadcast %163 : vector<1x128xf32> to vector<8x128xf32>
    %165 = arith.subf %159, %164 : vector<8x128xf32>
    %166 = arith.mulf %165, %165 : vector<8x128xf32>
    %cst_32 = arith.constant dense<0.000000e+00> : vector<128xf32>
    %167 = vector.multi_reduction <add>, %166, %cst_32 [0] : vector<8x128xf32> to vector<128xf32>
    %168 = vector.shape_cast %167 : vector<128xf32> to vector<1x128xf32>
    %cst_33 = arith.constant 8.000000e+00 : f32
    %169 = vector.broadcast %cst_33 : f32 to vector<1x128xf32>
    %170 = arith.divf %168, %169 : vector<1x128xf32>
    %cst_34 = arith.constant 9.99999974E-6 : f32
    %171 = vector.broadcast %cst_34 : f32 to vector<1x128xf32>
    %172 = arith.addf %170, %171 : vector<1x128xf32>
    %173 = math.rsqrt %172 : vector<1x128xf32>
    %174 = vector.broadcast %173 : vector<1x128xf32> to vector<8x128xf32>
    %175 = arith.mulf %165, %174 : vector<8x128xf32>
    %176 = vector.broadcast %4 : vector<8x1xf32> to vector<8x128xf32>
    %177 = arith.mulf %175, %176 : vector<8x128xf32>
    %178 = vector.broadcast %5 : vector<8x1xf32> to vector<8x128xf32>
    %179 = arith.addf %177, %178 : vector<8x128xf32>
    %cst_35 = arith.constant 0.000000e+00 : f32
    %180 = vector.broadcast %cst_35 : f32 to vector<8x128xf32>
    %181 = arith.maximumf %179, %180 : vector<8x128xf32>
    %c0_36 = arith.constant 0 : index
    %c0_37 = arith.constant 0 : index
    %c0_38 = arith.constant 0 : index
    %182 = vector.load %arg9[%c0_36, %c0_37, %c0_38] : memref<1x8x128xf32, #tpu.memory_space<vmem>>, vector<1x8x128xf32>
    %183 = vector.shape_cast %182 : vector<1x8x128xf32> to vector<8x128xf32>
    %184 = vector.shape_cast %181 : vector<8x128xf32> to vector<1x8x128xf32>
    tpu.vector_store %arg9[%c0_36, %c0_37, %c0_38], %184 {strides = array<i32>} : memref<1x8x128xf32, #tpu.memory_space<vmem>>, vector<1x8x128xf32>,
    return
  }
  func.func @transform_0(%arg0: i32, %arg1: i32, %arg2: memref<2xi32, #tpu.memory_space<smem>>) -> (i32, i32, i32) {
    %c0_i32 = arith.constant 0 : i32
    %c0_i32_0 = arith.constant 0 : i32
    return %arg0, %c0_i32, %arg1 : i32, i32, i32
  }
  func.func @transform_1(%arg0: i32, %arg1: i32, %arg2: memref<2xi32, #tpu.memory_space<smem>>) -> (i32, i32, i32) {
    %c0_i32 = arith.constant 0 : i32
    %0 = arith.minsi %arg1, %c0_i32 : i32
    %c0_i32_0 = arith.constant 0 : i32
    %c0_i32_1 = arith.constant 0 : i32
    return %arg0, %c0_i32_0, %0 : i32, i32, i32
  }
  func.func @transform_2(%arg0: i32, %arg1: i32, %arg2: memref<2xi32, #tpu.memory_space<smem>>) -> (i32, i32, i32) {
    %c1_i32 = arith.constant 1 : i32
    %0 = arith.addi %arg1, %c1_i32 : i32
    %c1_i32_0 = arith.constant 1 : i32
    %1 = arith.muli %0, %c1_i32_0 : i32
    %c0_i32 = arith.constant 0 : i32
    %2 = arith.minsi %1, %c0_i32 : i32
    %c0_i32_1 = arith.constant 0 : i32
    %c0_i32_2 = arith.constant 0 : i32
    return %arg0, %c0_i32_1, %2 : i32, i32, i32
  }
  func.func @transform_3(%arg0: i32, %arg1: i32, %arg2: memref<2xi32, #tpu.memory_space<smem>>) -> (i32, i32) {
    %c0_i32 = arith.constant 0 : i32
    %c0_i32_0 = arith.constant 0 : i32
    %c0_i32_1 = arith.constant 0 : i32
    return %c0_i32, %c0_i32_0 : i32, i32
  }
  func.func @transform_4(%arg0: i32, %arg1: i32, %arg2: memref<2xi32, #tpu.memory_space<smem>>) -> (i32, i32) {
    %c0_i32 = arith.constant 0 : i32
    %c0_i32_0 = arith.constant 0 : i32
    %c0_i32_1 = arith.constant 0 : i32
    return %c0_i32, %c0_i32_0 : i32, i32
  }
  func.func @transform_5(%arg0: i32, %arg1: i32, %arg2: memref<2xi32, #tpu.memory_space<smem>>) -> (i32, i32) {
    %c0_i32 = arith.constant 0 : i32
    %c0_i32_0 = arith.constant 0 : i32
    %c0_i32_1 = arith.constant 0 : i32
    return %c0_i32, %c0_i32_0 : i32, i32
  }
  func.func @transform_6(%arg0: i32, %arg1: i32, %arg2: memref<2xi32, #tpu.memory_space<smem>>) -> (i32, i32, i32) {
    %c0_i32 = arith.constant 0 : i32
    %c0_i32_0 = arith.constant 0 : i32
    return %arg0, %c0_i32, %arg1 : i32, i32, i32
  }
}

</mosaic_0001>

<llo_original>
// kernel: conv_norm_act.1
$region0: #{conv_norm_act.1}
  #allocation0 [shape = 'u32[]', space=smem, size = 0x4, offset = 0x4, fixed_abs, tag = 'smem constant byte address 0x4 - core index']
  #allocation1 [shape = 'u32[72,128]{1,0:T(1,128)}', space=vmem, size = 0x9000, scoped, tag = 'internal scratch']
  #allocation2 [shape = 's32[1]{0}', space=sflag, size = 0x4, scoped, tag = 'scoped memory for conv_norm_act.1']
  #allocation3 [shape = 'u8[512]{0}', space=smem, size = 0x200, scoped, tag = 'prefetched SMEM operand 0']
  %s0 = inlined_call_operand.vmem [shape: s32[2], index: 0, kind: input, shape index: {}]
  %s1 = inlined_call_operand.vmem [shape: f32[2,4,8], index: 1, kind: input, shape index: {}, may-alias: {1,3}]
  %s2 = inlined_call_operand.vmem [shape: f32[2,4,8], index: 2, kind: input, shape index: {}]
  %s3 = inlined_call_operand.vmem [shape: f32[2,4,8], index: 3, kind: input, shape index: {}, may-alias: {1,3}]
  %s4 = inlined_call_operand.vmem [shape: f32[8,12], index: 4, kind: input, shape index: {}]
  %s5 = inlined_call_operand.vmem [shape: f32[8,1], index: 5, kind: input, shape index: {}]
  %s6 = inlined_call_operand.vmem [shape: f32[8,1], index: 6, kind: input, shape index: {}]
  %s7 = inlined_call_operand.hbm [shape: f32[2,8,8], index: 7, kind: output, shape index: {}]
  %s8 = sld [smem:[#allocation0]]
  $region57: #{conv_norm_act.1} parent=0
    _
  %s10 = ssub.s32 1, %s8
  %s11 = scalar_select 0, %s10, %s8
  %s13 = sshll.u32 %s0, 4
  %s14 = int_to_ptr.vmem [resolvable:$true] %s13
  %16 = dma.vmem_to_smem %s14, 16, [#allocation3], [#allocation2]
  %18 = dma.done [#allocation2], 16
  %19 = sfence
  $region1: #{conv_norm_act.1} parent=0
    #allocation4 [shape = 'u8[8192]{0}', space=vmem, size = 0x2000, scoped, tag = 'output window, operand 0']
    #allocation5 [shape = 's32[2]{0}', space=sflag, size = 0x8, scoped, tag = 'scoped memory for conv_norm_act.1']
    %20 = vsyncpa [#allocation5], 0
    %s21 = scalar_lea.sflag [#allocation5], 1
    %22 = vsyncpa %s21, 0
    loop: start=0, step=1, limit=4
    $region2: #{conv_norm_act.1} parent=1 // loop_pre_header
      _
    $region3: #{conv_norm_act.1} parent=1 // loop_header
      %s24 = sphi 0, %s28
      %p25 = scmp.ge.s32.totalorder %s24, 4
      %s31 = sphi 0, %s43
      %s32 = sphi 0, %s39
      %s33 = sphi 0, %s31
      %s34 = sphi 0, %s32
      %s35 = sphi 0, %s33
      %s36 = sphi 0, %s34
      %s48 = sphi 0, %s50
      %s51 = sphi 0, %s48
      %s52 = sphi 0, %s51
      %s68 = sphi 0, %s52
      %s80 = sphi 0, %s82
      %s83 = sphi 0, %s80
      %s84 = sphi 0, %s83
      %s100 = sphi 0, %s84
      %s114 = sphi 0, %s116
      %s117 = sphi 0, %s114
      %s118 = sphi 0, %s117
      %s134 = sphi 0, %s118
      %s138 = sphi 0, %s138
      %s140 = sphi 0, %s138
      %s141 = sphi 0, %s140
      %s155 = sphi 0, %s141
      %s159 = sphi 0, %s159
      %s161 = sphi 0, %s159
      %s162 = sphi 0, %s161
      %s176 = sphi 0, %s162
      %s180 = sphi 0, %s180
      %s182 = sphi 0, %s180
      %s183 = sphi 0, %s182
      %s197 = sphi 0, %s183
      %s205 = sphi 0, %s207
      %s208 = sphi 0, %s205
      %s209 = sphi 0, %s208
      %s225 = sphi 0, %s209
    $region4: #{conv_norm_act.1} parent=1 // loop_header_branch
      %27 = sbr.rel (%p25) target = $region8
    $region5: #{conv_norm_act.1} parent=1 // loop_body
      %s29 = ssub.s32 %s24, 1
      %s30 = ssub.s32 %s24, 2
      %s37 = sadd.s32 1, %s32
      %p38 = scmp.ge.s32.totalorder %s37, 1
      %s39 = scalar_select %p38, 0, %s37
      %s40 = sadd.s32 1, %s31
      %s41 = scalar_select %p38, %s40, %s31
      %p42 = scmp.ge.s32.totalorder %s41, 2
      %s43 = scalar_select %p42, 0, %s41
      %s44 = ssub.s32 %s31, %s43
      %s45 = ssub.s32 %s32, %s39
      %s46 = sor.u32 %s44, %s45
      %p47 = scmp.eq.s32.totalorder %s46, 0
      %s49 = sadd.s32 %s48, 1
      %s50 = scalar_select %p47, %s48, %s49
      %p53 = pneg %p47
      %p54 = scmp.eq.s32.totalorder %s24, 1
      %p55 = por %p53, %p54
      %p56 = scmp.ne.s32.totalorder %s48, %s51
      %p57 = scmp.eq.s32.totalorder %s24, 0
      %p58 = por %p56, %p57
      %p59 = scmp.ne.s32.totalorder %s48, %s51
      %p60 = scmp.eq.s32.totalorder %s29, 1
      %p61 = por %p59, %p60
      %p62 = scmp.ne.s32.totalorder %s51, %s52
      %p63 = scmp.eq.s32.totalorder %s29, 0
      %p64 = por %p62, %p63
      %p65 = scmp.ne.s32.totalorder %s51, %s52
      %p66 = scmp.eq.s32.totalorder %s30, 1
      %p67 = por %p65, %p66
      %p69 = scmp.ne.s32.totalorder %s52, %s68
      %p70 = scmp.eq.s32.totalorder %s30, 0
      %p71 = por %p69, %p70
      %p72 = scmp.lt.s32.totalorder %s32, 0
      %s73 = scalar_select %p72, %s32, 0
      %p74 = scmp.lt.s32.totalorder %s39, 0
      %s75 = scalar_select %p74, %s39, 0
      %s76 = ssub.s32 %s31, %s43
      %s77 = ssub.s32 %s73, %s75
      %s78 = sor.u32 %s76, %s77
      %p79 = scmp.eq.s32.totalorder %s78, 0
      %s81 = sadd.s32 %s80, 1
      %s82 = scalar_select %p79, %s80, %s81
      %p85 = pneg %p79
      %p86 = scmp.eq.s32.totalorder %s24, 1
      %p87 = por %p85, %p86
      %p88 = scmp.ne.s32.totalorder %s80, %s83
      %p89 = scmp.eq.s32.totalorder %s24, 0
      %p90 = por %p88, %p89
      %p91 = scmp.ne.s32.totalorder %s80, %s83
      %p92 = scmp.eq.s32.totalorder %s29, 1
      %p93 = por %p91, %p92
      %p94 = scmp.ne.s32.totalorder %s83, %s84
      %p95 = scmp.eq.s32.totalorder %s29, 0
      %p96 = por %p94, %p95
      %p97 = scmp.ne.s32.totalorder %s83, %s84
      %p98 = scmp.eq.s32.totalorder %s30, 1
      %p99 = por %p97, %p98
      %p101 = scmp.ne.s32.totalorder %s84, %s100
      %p102 = scmp.eq.s32.totalorder %s30, 0
      %p103 = por %p101, %p102
      %s104 = sadd.s32 %s32, 1
      %p105 = scmp.lt.s32.totalorder %s104, 0
      %s106 = scalar_select %p105, %s104, 0
      %s107 = sadd.s32 %s39, 1
      %p108 = scmp.lt.s32.totalorder %s107, 0
      %s109 = scalar_select %p108, %s107, 0
      %s110 = ssub.s32 %s31, %s43
      %s111 = ssub.s32 %s106, %s109
      %s112 = sor.u32 %s110, %s111
      %p113 = scmp.eq.s32.totalorder %s112, 0
      %s115 = sadd.s32 %s114, 1
      %s116 = scalar_select %p113, %s114, %s115
      %p119 = pneg %p113
      %p120 = scmp.eq.s32.totalorder %s24, 1
      %p121 = por %p119, %p120
      %p122 = scmp.ne.s32.totalorder %s114, %s117
      %p123 = scmp.eq.s32.totalorder %s24, 0
      %p124 = por %p122, %p123
      %p125 = scmp.ne.s32.totalorder %s114, %s117
      %p126 = scmp.eq.s32.totalorder %s29, 1
      %p127 = por %p125, %p126
      %p128 = scmp.ne.s32.totalorder %s117, %s118
      %p129 = scmp.eq.s32.totalorder %s29, 0
      %p130 = por %p128, %p129
      %p131 = scmp.ne.s32.totalorder %s117, %s118
      %p132 = scmp.eq.s32.totalorder %s30, 1
      %p133 = por %p131, %p132
      %p135 = scmp.ne.s32.totalorder %s118, %s134
      %p136 = scmp.eq.s32.totalorder %s30, 0
      %p137 = por %p135, %p136
      %s139 = sadd.s32 %s138, 1
      %p142 = scmp.eq.s32.totalorder %s24, 1
      %p143 = scmp.ne.s32.totalorder %s138, %s140
      %p144 = scmp.eq.s32.totalorder %s24, 0
      %p145 = por %p143, %p144
      %p146 = scmp.ne.s32.totalorder %s138, %s140
      %p147 = scmp.eq.s32.totalorder %s29, 1
      %p148 = por %p146, %p147
      %p149 = scmp.ne.s32.totalorder %s140, %s141
      %p150 = scmp.eq.s32.totalorder %s29, 0
      %p151 = por %p149, %p150
      %p152 = scmp.ne.s32.totalorder %s140, %s141
      %p153 = scmp.eq.s32.totalorder %s30, 1
      %p154 = por %p152, %p153
      %p156 = scmp.ne.s32.totalorder %s141, %s155
      %p157 = scmp.eq.s32.totalorder %s30, 0
      %p158 = por %p156, %p157
      %s160 = sadd.s32 %s159, 1
      %p163 = scmp.eq.s32.totalorder %s24, 1
      %p164 = scmp.ne.s32.totalorder %s159, %s161
      %p165 = scmp.eq.s32.totalorder %s24, 0
      %p166 = por %p164, %p165
      %p167 = scmp.ne.s32.totalorder %s159, %s161
      %p168 = scmp.eq.s32.totalorder %s29, 1
      %p169 = por %p167, %p168
      %p170 = scmp.ne.s32.totalorder %s161, %s162
      %p171 = scmp.eq.s32.totalorder %s29, 0
      %p172 = por %p170, %p171
      %p173 = scmp.ne.s32.totalorder %s161, %s162
      %p174 = scmp.eq.s32.totalorder %s30, 1
      %p175 = por %p173, %p174
      %p177 = scmp.ne.s32.totalorder %s162, %s176
      %p178 = scmp.eq.s32.totalorder %s30, 0
      %p179 = por %p177, %p178
      %s181 = sadd.s32 %s180, 1
      %p184 = scmp.eq.s32.totalorder %s24, 1
      %p185 = scmp.ne.s32.totalorder %s180, %s182
      %p186 = scmp.eq.s32.totalorder %s24, 0
      %p187 = por %p185, %p186
      %p188 = scmp.ne.s32.totalorder %s180, %s182
      %p189 = scmp.eq.s32.totalorder %s29, 1
      %p190 = por %p188, %p189
      %p191 = scmp.ne.s32.totalorder %s182, %s183
      %p192 = scmp.eq.s32.totalorder %s29, 0
      %p193 = por %p191, %p192
      %p194 = scmp.ne.s32.totalorder %s182, %s183
      %p195 = scmp.eq.s32.totalorder %s30, 1
      %p196 = por %p194, %p195
      %p198 = scmp.ne.s32.totalorder %s183, %s197
      %p199 = scmp.eq.s32.totalorder %s30, 0
      %p200 = por %p198, %p199
      %s201 = ssub.s32 %s31, %s43
      %s202 = ssub.s32 %s32, %s39
      %s203 = sor.u32 %s201, %s202
      %p204 = scmp.eq.s32.totalorder %s203, 0
      %s206 = sadd.s32 %s205, 1
      %s207 = scalar_select %p204, %s205, %s206
      %p210 = pneg %p204
      %p211 = scmp.eq.s32.totalorder %s24, 1
      %p212 = por %p210, %p211
      %p213 = scmp.ne.s32.totalorder %s205, %s208
      %p214 = scmp.eq.s32.totalorder %s24, 0
      %p215 = por %p213, %p214
      %p216 = scmp.ne.s32.totalorder %s205, %s208
      %p217 = scmp.eq.s32.totalorder %s29, 1
      %p218 = por %p216, %p217
      %p219 = scmp.ne.s32.totalorder %s208, %s209
      %p220 = scmp.eq.s32.totalorder %s29, 0
      %p221 = por %p219, %p220
      %p222 = scmp.ne.s32.totalorder %s208, %s209
      %p223 = scmp.eq.s32.totalorder %s30, 1
      %p224 = por %p222, %p223
      %p226 = scmp.ne.s32.totalorder %s209, %s225
      %p227 = scmp.eq.s32.totalorder %s30, 0
      %p228 = por %p226, %p227
      %p229 = scmp.le.s32.totalorder 1, %s24
      %p230 = scmp.lt.s32.totalorder %s24, 3
      %p231 = pnand %p229, %p230
      %p232 = pneg %p231
      // Predicated region
      $region9: #{conv_norm_act.1} parent=5 // pred_check
        _
      $region10: #{conv_norm_act.1} parent=5 // pred_check_branch
        %234 = sbr.rel (%p231) target = $region12
      $region11: #{conv_norm_act.1} parent=5 // pred_region
        %s235 = ssub.s32 %s24, 1
        // Predicated region
        $region13: #{conv_norm_act.1} parent=11 // pred_check
          %p236 = pneg %p151
        $region14: #{conv_norm_act.1} parent=11 // pred_check_branch
          %238 = sbr.rel (%p236) target = $region16
        $region15: #{conv_norm_act.1} parent=11 // pred_region
          _
        $region16: #{conv_norm_act.1} parent=11 // pred_fallthru
          _
        // Predicated region
        $region17: #{conv_norm_act.1} parent=11 // pred_check
          %p239 = pneg %p172
        $region18: #{conv_norm_act.1} parent=11 // pred_check_branch
          %241 = sbr.rel (%p239) target = $region20
        $region19: #{conv_norm_act.1} parent=11 // pred_region
          _
        $region20: #{conv_norm_act.1} parent=11 // pred_fallthru
          _
        // Predicated region
        $region21: #{conv_norm_act.1} parent=11 // pred_check
          %p242 = pneg %p193
        $region22: #{conv_norm_act.1} parent=11 // pred_check_branch
          %244 = sbr.rel (%p242) target = $region24
        $region23: #{conv_norm_act.1} parent=11 // pred_region
          _
        $region24: #{conv_norm_act.1} parent=11 // pred_fallthru
          _
      $region12: #{conv_norm_act.1} parent=5 // pred_fallthru
        _
      %p245 = scmp.lt.s32.totalorder %s24, 2
      // Predicated region
      $region25: #{conv_norm_act.1} parent=5 // pred_check
        %p246 = pneg %p245
      $region26: #{conv_norm_act.1} parent=5 // pred_check_branch
        %248 = sbr.rel (%p246) target = $region28
      $region27: #{conv_norm_act.1} parent=5 // pred_region
        // Predicated region
        $region29: #{conv_norm_act.1} parent=27 // pred_check
          %p249 = pneg %p58
        $region30: #{conv_norm_act.1} parent=27 // pred_check_branch
          %251 = sbr.rel (%p249) target = $region32
        $region31: #{conv_norm_act.1} parent=27 // pred_region
          %p252 = scmp.lt.s32.totalorder %s31, 1
          %s253 = scalar_select %p252, %s31, 1
          %p254 = scmp.lt.s32.totalorder %s32, 0
          %s255 = scalar_select %p254, %s32, 0
          %s256 = sadd.s32 %s255, %s253
          %s257 = smul.addr %s256, 4
          %s258 = scalar_lea.vmem %s1, %s257
        $region32: #{conv_norm_act.1} parent=27 // pred_fallthru
          _
        // Predicated region
        $region33: #{conv_norm_act.1} parent=27 // pred_check
          %p259 = pneg %p90
        $region34: #{conv_norm_act.1} parent=27 // pred_check_branch
          %261 = sbr.rel (%p259) target = $region36
        $region35: #{conv_norm_act.1} parent=27 // pred_region
          %p262 = scmp.lt.s32.totalorder %s32, 0
          %s263 = scalar_select %p262, %s32, 0
          %p264 = scmp.lt.s32.totalorder %s31, 1
          %s265 = scalar_select %p264, %s31, 1
          %p266 = scmp.lt.s32.totalorder %s263, 0
          %s267 = scalar_select %p266, %s263, 0
          %s268 = sadd.s32 %s267, %s265
          %s269 = smul.addr %s268, 4
          %s270 = scalar_lea.vmem %s2, %s269
          %p271 = scmp.lt.s32.totalorder %s32, 0
          %s272 = scalar_select %p271, %s32, 0
        $region36: #{conv_norm_act.1} parent=27 // pred_fallthru
          _
        // Predicated region
        $region37: #{conv_norm_act.1} parent=27 // pred_check
          %p273 = pneg %p124
        $region38: #{conv_norm_act.1} parent=27 // pred_check_branch
          %275 = sbr.rel (%p273) target = $region40
        $region39: #{conv_norm_act.1} parent=27 // pred_region
          %s276 = sadd.s32 %s32, 1
          %p277 = scmp.lt.s32.totalorder %s276, 0
          %s278 = scalar_select %p277, %s276, 0
          %p279 = scmp.lt.s32.totalorder %s31, 1
          %s280 = scalar_select %p279, %s31, 1
          %p281 = scmp.lt.s32.totalorder %s278, 0
          %s282 = scalar_select %p281, %s278, 0
          %s283 = sadd.s32 %s282, %s280
          %s284 = smul.addr %s283, 4
          %s285 = scalar_lea.vmem %s3, %s284
          %s286 = sadd.s32 %s32, 1
          %p287 = scmp.lt.s32.totalorder %s286, 0
          %s288 = scalar_select %p287, %s286, 0
        $region40: #{conv_norm_act.1} parent=27 // pred_fallthru
          _
      $region28: #{conv_norm_act.1} parent=5 // pred_fallthru
        _
      %p289 = scmp.le.s32.totalorder 1, %s24
      %p290 = scmp.lt.s32.totalorder %s24, 3
      %p291 = pnand %p289, %p290
      %p292 = pneg %p291
      // Predicated region
      $region41: #{conv_norm_act.1} parent=5 // pred_check
        _
      $region42: #{conv_norm_act.1} parent=5 // pred_check_branch
        %294 = sbr.rel (%p291) target = $region44
      $region43: #{conv_norm_act.1} parent=5 // pred_region
        %s295 = ssub.s32 %s24, 1
        %p296 = scmp.lt.s32.totalorder %s33, 1
        %s297 = scalar_select %p296, %s33, 1
        %p298 = scmp.lt.s32.totalorder %s34, 0
        %s299 = scalar_select %p298, %s34, 0
        %s300 = sadd.s32 %s299, %s297
        %s301 = smul.addr %s300, 4
        %s302 = scalar_lea.vmem %s1, %s301
        %p303 = pneg %p64
        %p304 = pneg %p61
        %p305 = scmp.lt.s32.totalorder %s34, 0
        %s306 = scalar_select %p305, %s34, 0
        %p307 = scmp.lt.s32.totalorder %s33, 1
        %s308 = scalar_select %p307, %s33, 1
        %p309 = scmp.lt.s32.totalorder %s306, 0
        %s310 = scalar_select %p309, %s306, 0
        %s311 = sadd.s32 %s310, %s308
        %s312 = smul.addr %s311, 4
        %s313 = scalar_lea.vmem %s2, %s312
        %p314 = pneg %p96
        %p315 = pneg %p93
        %s316 = sadd.s32 %s34, 1
        %p317 = scmp.lt.s32.totalorder %s316, 0
        %s318 = scalar_select %p317, %s316, 0
        %p319 = scmp.lt.s32.totalorder %s33, 1
        %s320 = scalar_select %p319, %s33, 1
        %p321 = scmp.lt.s32.totalorder %s318, 0
        %s322 = scalar_select %p321, %s318, 0
        %s323 = sadd.s32 %s322, %s320
        %s324 = smul.addr %s323, 4
        %s325 = scalar_lea.vmem %s3, %s324
        %p326 = pneg %p130
        %p327 = pneg %p127
        %p328 = pneg %p151
        %p329 = pneg %p148
        %p330 = pneg %p172
        %p331 = pneg %p169
        %p332 = pneg %p193
        %p333 = pneg %p190
        %p334 = pneg %p221
        %p335 = pneg %p218
        %s336 = sand.u32 %s208, 1
        %s337 = scalar_lea.sflag [#allocation5], %s336
        %s338 = sand.u32 %s208, 1
        %s339 = smul.addr %s338, 8
        %s340 = scalar_lea.vmem [#allocation4], %s339
        %p341 = scmp.lt.s32.totalorder %s33, 1
        %s342 = scalar_select %p341, %s33, 1
        %p343 = scmp.lt.s32.totalorder %s34, 0
        %s344 = scalar_select %p343, %s34, 0
        %s345 = sadd.s32 %s344, %s342
        %s346 = smul.addr %s345, 4
        %s347 = scalar_lea.vmem %s1, %s346
        %p348 = scmp.lt.s32.totalorder %s34, 0
        %s349 = scalar_select %p348, %s34, 0
        %p350 = scmp.lt.s32.totalorder %s33, 1
        %s351 = scalar_select %p350, %s33, 1
        %p352 = scmp.lt.s32.totalorder %s349, 0
        %s353 = scalar_select %p352, %s349, 0
        %s354 = sadd.s32 %s353, %s351
        %s355 = smul.addr %s354, 4
        %s356 = scalar_lea.vmem %s2, %s355
        %p357 = scmp.lt.s32.totalorder %s34, 0
        %s358 = scalar_select %p357, %s34, 0
        %s359 = sadd.s32 %s34, 1
        %p360 = scmp.lt.s32.totalorder %s359, 0
        %s361 = scalar_select %p360, %s359, 0
        %p362 = scmp.lt.s32.totalorder %s33, 1
        %s363 = scalar_select %p362, %s33, 1
        %p364 = scmp.lt.s32.totalorder %s361, 0
        %s365 = scalar_select %p364, %s361, 0
        %s366 = sadd.s32 %s365, %s363
        %s367 = smul.addr %s366, 4
        %s368 = scalar_lea.vmem %s3, %s367
        %s369 = sadd.s32 %s34, 1
        %p370 = scmp.lt.s32.totalorder %s369, 0
        %s371 = scalar_select %p370, %s369, 0
        %s372 = smul.u32 %s34, 128
        %s373 = sld [smem:[#allocation3 + %s33]]
        %v374 = vld [vmem:[%s4] sm:$0xff]
        %v375 = vld [vmem:[%s5] sm:$0xff]
        %v376 = vld [vmem:[%s6] sm:$0xff]
        %v377 = vlaneseq
        %v378 = vand.u32 %v377, 127
        %v379 = vld [vmem:[%s347] sm:$0xf]
        %v380 = vld [vmem:[%s356] sm:$0xf]
        %v381 = vstv %s372
        %v382 = vadd.s32 %v381, %v378
        %v383 = vmul.u32 %v382, 2
        %vm384 = vcmp.ge.s32.totalorder %v383, 0
        %v385 = vstv %s373
        %vm386 = vcmp.lt.s32.totalorder %v383, %v385
        %vm387 = vmand %vm384, %vm386
        %v388 = vsel %vm387, 1, 0
        %vm389 = vcmp.eq.s32.totalorder %v388, 1
        %v390 = vsel %vm389, %v379, 0.0
        %v391 = vperm.slane %v390, 0
        %393 = vset.pattern.permute.xlu0 0
        %394 = vperm.xlu0 %393, %v374
        %v395 = vpop.permute.xlu0 %394
        %v397 = vmul.f32 %v391, %v395
        %v398 = vadd.f32 %v397, 0.0
        %v399 = vperm.slane %v390, 1
        %400 = vset.pattern.permute.xlu0 3
        %401 = vperm.xlu0 %400, %v374
        %v402 = vpop.permute.xlu0 %401
        %v404 = vmul.f32 %v399, %v402
        %v405 = vadd.f32 %v398, %v404
        %v406 = vperm.slane %v390, 2
        %407 = vset.pattern.permute.xlu0 6
        %408 = vperm.xlu0 %407, %v374
        %v409 = vpop.permute.xlu0 %408
        %v411 = vmul.f32 %v406, %v409
        %v412 = vadd.f32 %v405, %v411
        %v413 = vperm.slane %v390, 3
        %414 = vset.pattern.permute.xlu0 9
        %415 = vperm.xlu0 %414, %v374
        %v416 = vpop.permute.xlu0 %415
        %v418 = vmul.f32 %v413, %v416
        %v419 = vadd.f32 %v412, %v418
        %v420 = vadd.s32 %v383, 1
        %vm421 = vcmp.ge.s32.totalorder %v420, 0
        %vm422 = vcmp.lt.s32.totalorder %v420, %v385
        %vm423 = vmand %vm421, %vm422
        %v424 = vsel %vm423, 1, 0
        %vm425 = vcmp.eq.s32.totalorder %v424, 1
        %v426 = vsel %vm425, %v380, 0.0
        %v427 = vperm.slane %v426, 0
        %428 = vset.pattern.permute.xlu0 1
        %429 = vperm.xlu0 %428, %v374
        %v430 = vpop.permute.xlu0 %429
        %v432 = vmul.f32 %v427, %v430
        %v433 = vadd.f32 %v419, %v432
        %v434 = vperm.slane %v426, 1
        %435 = vset.pattern.permute.xlu0 4
        %436 = vperm.xlu0 %435, %v374
        %v437 = vpop.permute.xlu0 %436
        %v439 = vmul.f32 %v434, %v437
        %v440 = vadd.f32 %v433, %v439
        %v441 = vperm.slane %v426, 2
        %442 = vset.pattern.permute.xlu0 7
        %443 = vperm.xlu0 %442, %v374
        %v444 = vpop.permute.xlu0 %443
        %v446 = vmul.f32 %v441, %v444
        %v447 = vadd.f32 %v440, %v446
        %v448 = vperm.slane %v426, 3
        %449 = vset.pattern.permute.xlu0 10
        %450 = vperm.xlu0 %449, %v374
        %v451 = vpop.permute.xlu0 %450
        %v453 = vmul.f32 %v448, %v451
        %v454 = vadd.f32 %v447, %v453
        %v455 = vld [vmem:[%s368] sm:$0xf]
        %456 = vrot.lane.b32.xlu0 %v379, 127
        %v457 = vpop.permute.xlu0 %456
        %vm458 = vcmp.ge.s32.totalorder %v378, 127
        %v459 = vsel %vm458, 1, 0
        %vm460 = vcmp.eq.s32.totalorder %v459, 1
        %462 = vset.pattern.permute.xlu0 0
        %463 = vperm.xlu0 %462, %v455
        %v464 = vpop.permute.xlu0 %463
        %v466 = vsel %vm460, %v464, %v457
        %v467 = vadd.s32 %v382, 1
        %v468 = vmul.u32 %v467, 2
        %vm469 = vcmp.ge.s32.totalorder %v468, 0
        %vm470 = vcmp.lt.s32.totalorder %v468, %v385
        %vm471 = vmand %vm469, %vm470
        %v472 = vsel %vm471, 1, 0
        %vm473 = vcmp.eq.s32.totalorder %v472, 1
        %v474 = vsel %vm473, %v466, 0.0
        %v475 = vperm.slane %v474, 0
        %476 = vset.pattern.permute.xlu0 2
        %477 = vperm.xlu0 %476, %v374
        %v478 = vpop.permute.xlu0 %477
        %v480 = vmul.f32 %v475, %v478
        %v481 = vadd.f32 %v454, %v480
        %v482 = vperm.slane %v474, 1
        %483 = vset.pattern.permute.xlu0 5
        %484 = vperm.xlu0 %483, %v374
        %v485 = vpop.permute.xlu0 %484
        %v487 = vmul.f32 %v482, %v485
        %v488 = vadd.f32 %v481, %v487
        %v489 = vperm.slane %v474, 2
        %490 = vset.pattern.permute.xlu0 8
        %491 = vperm.xlu0 %490, %v374
        %v492 = vpop.permute.xlu0 %491
        %v494 = vmul.f32 %v489, %v492
        %v495 = vadd.f32 %v488, %v494
        %v496 = vperm.slane %v474, 3
        %497 = vset.pattern.permute.xlu0 11
        %498 = vperm.xlu0 %497, %v374
        %v499 = vpop.permute.xlu0 %498
        %v501 = vmul.f32 %v496, %v499
        %v502 = vadd.f32 %v495, %v501
        %v503 = vrot.slane %v502, 4
        %v504 = vadd.f32 %v502, %v503
        %v505 = vrot.slane %v504, 2
        %v506 = vadd.f32 %v504, %v505
        %v507 = vrot.slane %v506, 1
        %v508 = vadd.f32 %v506, %v507
        %v509 = vrcp.pop 8.0
        %v510 = vmul.f32 8.0, %v509
        %v511 = vsub.f32 1.0, %v510
        %v512 = vmul.f32 %v509, %v511
        %v513 = vadd.f32 %v509, %v512
        %vm514 = vweird.f32 %v509
        %v515 = vsel %vm514, %v509, %v513
        %v516 = vmul.f32 %v508, %v515
        %v517 = vsub.f32 %v502, %v516
        %v518 = vmul.f32 %v517, %v517
        %v519 = vrot.slane %v518, 4
        %v520 = vadd.f32 %v518, %v519
        %v521 = vrot.slane %v520, 2
        %v522 = vadd.f32 %v520, %v521
        %v523 = vrot.slane %v522, 1
        %v524 = vadd.f32 %v522, %v523
        %v525 = vmul.f32 %v524, %v515
        %v526 = vadd.f32 %v525, 1e-05
        %v527 = vrsqrt.pop %v526
        %v528 = vmul.f32 %v527, %v526
        %v529 = vmul.f32 %v528, %v527
        %v530 = vmul.f32 0.5, %v529
        %v531 = vsub.f32 1.5, %v530
        %v532 = vmul.f32 %v527, %v531
        %vm533 = vweird.f32 %v526
        %vm534 = vweird.f32 %v527
        %vm535 = vmor %vm533, %vm534
        %v536 = vsel %vm535, %v527, %v532
        %v537 = vmul.f32 %v517, %v536
        %539 = vset.pattern.permute.xlu0 0
        %540 = vperm.xlu0 %539, %v375
        %v541 = vpop.permute.xlu0 %540
        %v543 = vmul.f32 %v537, %v541
        %545 = vset.pattern.permute.xlu0 0
        %546 = vperm.xlu0 %545, %v376
        %v547 = vpop.permute.xlu0 %546
        %v549 = vadd.f32 %v543, %v547
        %v550 = vmax.f32 %v549, 0.0
        %551 = vst [vmem:[%s340] sm:$0xff] %v550
        %s552 = sand.u32 %s208, 1
        %s553 = scalar_lea.sflag [#allocation5], %s552
        %s554 = sand.u32 %s208, 1
        %s555 = smul.addr %s554, 8
        %s556 = scalar_lea.vmem [#allocation4], %s555
        // Predicated region
        $region45: #{conv_norm_act.1} parent=43 // pred_check
          %p557 = pneg %p218
        $region46: #{conv_norm_act.1} parent=43 // pred_check_branch
          %559 = sbr.rel (%p557) target = $region48
        $region47: #{conv_norm_act.1} parent=43 // pred_region
          %561 = vsyncadd %s553, 0
          %s562 = sadd.s32 %s34, %s33
          %s563 = smul.addr %s562, 8
          %s564 = scalar_lea.hbm %s7, %s563
          %s566 = sshll.u32 %s556, 4
          %s567 = int_to_ptr.vmem [resolvable:$true] %s566
          %s568 = sshll.u32 %s564, 4
          %s569 = int_to_ptr.hbm [resolvable:$true] %s568
          %571 = dma.vmem_to_hbm [thread:$0]  %s567, 128, %s569, %s553
        $region48: #{conv_norm_act.1} parent=43 // pred_fallthru
          _
      $region44: #{conv_norm_act.1} parent=5 // pred_fallthru
        _
      %p572 = scmp.le.s32.totalorder 2, %s24
      // Predicated region
      $region49: #{conv_norm_act.1} parent=5 // pred_check
        %p573 = pneg %p572
      $region50: #{conv_norm_act.1} parent=5 // pred_check_branch
        %575 = sbr.rel (%p573) target = $region52
      $region51: #{conv_norm_act.1} parent=5 // pred_region
        %s576 = ssub.s32 %s24, 2
        // Predicated region
        $region53: #{conv_norm_act.1} parent=51 // pred_check
          %p577 = pneg %p224
        $region54: #{conv_norm_act.1} parent=51 // pred_check_branch
          %579 = sbr.rel (%p577) target = $region56
        $region55: #{conv_norm_act.1} parent=51 // pred_region
          %s580 = sand.u32 %s209, 1
          %s581 = scalar_lea.sflag [#allocation5], %s580
          %s582 = sand.u32 %s209, 1
          %s583 = smul.addr %s582, 8
          %s584 = scalar_lea.vmem [#allocation4], %s583
          %586 = dma.done %s581, 128
        $region56: #{conv_norm_act.1} parent=51 // pred_fallthru
          _
      $region52: #{conv_norm_act.1} parent=5 // pred_fallthru
        _
    $region6: #{conv_norm_act.1} parent=1 // loop_footer
      %s28 = sadd.s32 1, %s24
    $region7: #{conv_norm_act.1} parent=1 // loop_footer_branch
      %23 = sbr.rel target = $region3
    $region8: #{conv_norm_act.1} parent=1 // loop_exit
      _
    %587 = vsyncpa [#allocation5], 1
    %s588 = scalar_lea.sflag [#allocation5], 1
    %589 = vsyncpa %s588, 1

</llo_original>
